<compile_context>
chip_gen: v6e
topology: v6e:2x2x1
jax: 0.10.0
libtpu: 0.0.40
codegen_flags: <defaults>
</compile_context>

<pallas_src>
import functools

import jax
import jax.numpy as jnp
from jax.experimental import pallas as pl
from jax.experimental.pallas import tpu as pltpu

_LANE = 128
_MIB = 1024 * 1024


def _round_up(v, m):
    return ((v + m - 1) // m) * m


def _tcn_block_kernel(x_hbm, w_ref, ss_ref, o_ref, xwin, sem, *,
                      kernel_size, dilation, tile_len, window_len):
    # x_hbm:  (N, l_alloc, C_in_p) bf16  stays in HBM; windowed slabs are DMA'd
    #                                    manually with double buffering
    # w_ref:  (K*C_in_p, C_out_p)  bf16  folded conv weight, VMEM resident
    # ss_ref: (2, C_out_p)         f32   row 0 = scale, row 1 = shift
    # o_ref:  (1, TL, C_out_p)     bf16  output tile
    # xwin:   (2, window, C_in_p)  bf16  VMEM double buffer for x slabs
    # sem:    DMA semaphores, shape (2,)
    n = pl.program_id(0)
    lt = pl.program_id(1)
    num_lt = pl.num_programs(1)
    slot = lt % 2
    cin_p = xwin.shape[2]

    def fetch(tile_idx, slot_idx):
        pltpu.make_async_copy(
            x_hbm.at[n, pl.ds(tile_idx * tile_len, window_len), :],
            xwin.at[slot_idx],
            sem.at[slot_idx]).start()

    # Prime the pipeline at the first L-tile of each batch element (the L axis
    # is "arbitrary", so every core starts its batch rows at lt == 0).
    @pl.when(lt == 0)
    def _():
        fetch(0, 0)

    # Wait for the current tile's slab (started by the priming above or by the
    # previous tile's prefetch).
    pltpu.make_async_copy(
        x_hbm.at[n, pl.ds(lt * tile_len, window_len), :],
        xwin.at[slot],
        sem.at[slot]).wait()

    # Prefetch the next tile's slab into the other slot while we compute.
    @pl.when(lt + 1 < num_lt)
    def _():
        fetch(lt + 1, 1 - slot)

    win = xwin[slot]                                  # (window, C_in_p) bf16
    # K dilated taps as K accumulated matmuls (no im2col concat buffer); the
    # weight slices start at multiples of C_in_p (>=128), i.e. aligned.
    acc = jnp.dot(win[0:tile_len, :], w_ref[0:cin_p, :],
                  preferred_element_type=jnp.float32)
    for k in range(1, kernel_size):
        off = k * dilation
        acc += jnp.dot(win[off:off + tile_len, :],
                       w_ref[k * cin_p:(k + 1) * cin_p, :],
                       preferred_element_type=jnp.float32)

    # Fused conv-bias + BatchNorm1d (running stats) epilogue in f32, then ReLU.
    y = acc * ss_ref[0] + ss_ref[1]
    # dropout1 is the identity in eval mode.
    o_ref[0] = jnp.maximum(y, 0.0).astype(o_ref.dtype)


def tcn_block(x_ncl, weight, bias, gamma, beta, running_mean, running_var,
              *, kernel_size, dilation=1, eps=1e-5, tile_len=512,
              return_nlc=False):
    """x_ncl: (N, C_in, L) like PyTorch Conv1d input.

    Returns (N, C_out, L_out) in bf16 (or (N, L_out, C_out) if return_nlc=True,
    the cheap layout for stacking TCN blocks).
    """
    N, C_in, L = x_ncl.shape
    C_out = weight.shape[0]
    K = kernel_size
    padding = (K - 1) * dilation // 2
    halo = (K - 1) * dilation
    L_pad = L + 2 * padding
    out_len = L_pad - halo                              # PyTorch Conv1d L_out

    cin_p = _round_up(C_in, _LANE)
    cout_p = _round_up(C_out, _LANE)

    # --- choose the L-tile so the VMEM footprint fits a v7x-safe budget and
    # --- the last tile wastes < 8 rows of matmul + writeback.
    budget = 48 * _MIB                                  # usable target; 64 MiB part

    def footprint(tl_, window_):
        return (2 * window_ * cin_p * 2                 # x slab double buffer
                + 2 * K * cin_p * cout_p * 2            # weight (double-buffered)
                + 2 * 2 * cout_p * 4                    # scale/shift
                + 2 * tl_ * cout_p * 2                  # output tile double buffer
                + 2 * tl_ * cout_p * 4                  # f32 acc + epilogue temps
                + 2 * tl_ * cin_p * 2                   # tap realign copies
                + 4 * _MIB)                             # Mosaic internal scratch

    tl_cap = max(8, min(_round_up(tile_len, 8), _round_up(out_len, 8)))
    while tl_cap > 8 and footprint(tl_cap, _round_up(tl_cap + halo, 8)) > budget:
        tl_cap = max(8, _round_up(tl_cap // 2, 8))
    num_tiles = pl.cdiv(out_len, tl_cap)
    tl = min(_round_up(pl.cdiv(out_len, num_tiles), 8), tl_cap)
    num_tiles = pl.cdiv(out_len, tl)
    window = _round_up(tl + halo, 8)
    out_len_p = num_tiles * tl
    l_alloc = (num_tiles - 1) * tl + window             # >= L_pad
    need = footprint(tl, window)
    # Derived VMEM limit with headroom, capped so it is legal on v7x (64 MiB).
    vmem_limit = int(min(56 * _MIB, max(2 * need, 16 * _MIB)))

    # Fuse conv bias + BN(running stats) into one per-channel scale/shift (f32),
    # packed into a single (2, C_out_p) input.
    scale = gamma / jnp.sqrt(running_var + eps)
    shift = beta + (bias - running_mean) * scale
    ss = jnp.zeros((2, cout_p), jnp.float32)
    ss = ss.at[0, :C_out].set(scale.astype(jnp.float32))
    ss = ss.at[1, :C_out].set(shift.astype(jnp.float32))

    # Glue: NCL -> NLC, zero-pad L (conv padding + tile remainder) and channels,
    # cast activations to bf16 for the MXU.
    x_nlc = jnp.transpose(x_ncl, (0, 2, 1)).astype(jnp.bfloat16)
    x_pad = jnp.zeros((N, l_alloc, cin_p), jnp.bfloat16)
    x_pad = x_pad.at[:, padding:padding + L, :C_in].set(x_nlc)

    # Weight: (C_out, C_in, K) -> (K, C_in_p, C_out_p) -> (K*C_in_p, C_out_p).
    w_kic = jnp.transpose(weight, (2, 1, 0)).astype(jnp.bfloat16)
    w_p = jnp.zeros((K, cin_p, cout_p), jnp.bfloat16)
    w_p = w_p.at[:, :C_in, :C_out].set(w_kic)
    w2 = w_p.reshape(K * cin_p, cout_p)

    kern = functools.partial(_tcn_block_kernel, kernel_size=K,
                             dilation=dilation, tile_len=tl, window_len=window)

    out_nlc = pl.pallas_call(
        kern,
        out_shape=jax.ShapeDtypeStruct((N, out_len_p, cout_p), jnp.bfloat16),
        grid=(N, num_tiles),
        in_specs=[
            pl.BlockSpec(memory_space=pl.ANY),                       # x in HBM
            pl.BlockSpec((K * cin_p, cout_p), lambda n, l: (0, 0)),  # weight
            pl.BlockSpec((2, cout_p), lambda n, l: (0, 0)),          # scale/shift
        ],
        out_specs=pl.BlockSpec((1, tl, cout_p), lambda n, l: (n, l, 0)),
        scratch_shapes=[
            pltpu.VMEM((2, window, cin_p), jnp.bfloat16),
            pltpu.SemaphoreType.DMA((2,)),
        ],
        compiler_params=pltpu.CompilerParams(
            dimension_semantics=("parallel", "arbitrary"),
            vmem_limit_bytes=vmem_limit),
    )(x_pad, w2, ss)

    # Strip tile / channel padding.
    out_nlc = out_nlc[:, :out_len, :C_out]
    if return_nlc:
        return out_nlc
    return jnp.transpose(out_nlc, (0, 2, 1))


def _reference(x, weight, bias, gamma, beta, running_mean, running_var,
               *, kernel_size, dilation, eps=1e-5):
    padding = (kernel_size - 1) * dilation // 2
    conv = jax.lax.conv_general_dilated(
        x, weight, window_strides=(1,), padding=[(padding, padding)],
        rhs_dilation=(dilation,), dimension_numbers=("NCH", "OIH", "NCH"),
        precision=jax.lax.Precision.HIGHEST)
    conv = conv + bias[None, :, None]
    bn = (conv - running_mean[None, :, None]) / jnp.sqrt(
        running_var + eps)[None, :, None] * gamma[None, :, None] + beta[None, :, None]
    return jnp.maximum(bn, 0.0)


if __name__ == "__main__":
    # Small shapes consistent with the module: N=2, C_in=4, C_out=8, K=3.
    N, C_in, C_out, kernel_size = 2, 4, 8, 3

    key = jax.random.PRNGKey(0)
    kx, kw, kb, kg, kbeta, km, kv = jax.random.split(key, 7)

    x_full = jax.random.normal(kx, (N, C_in, 48), jnp.float32)
    weight = jax.random.normal(kw, (C_out, C_in, kernel_size), jnp.float32) * 0.3
    bias = jax.random.normal(kb, (C_out,), jnp.float32) * 0.1
    gamma = 1.0 + 0.1 * jax.random.normal(kg, (C_out,), jnp.float32)
    beta = 0.1 * jax.random.normal(kbeta, (C_out,), jnp.float32)
    running_mean = 0.05 * jax.random.normal(km, (C_out,), jnp.float32)
    running_var = 1.0 + 0.1 * jnp.abs(jax.random.normal(kv, (C_out,), jnp.float32))

    # The kernel feeds the MXU in bf16 (f32 accumulate) and stores bf16, so the
    # reference uses bf16-rounded inputs and a bf16-output tolerance.
    def check(L, dilation, tile_len):
        x = x_full[:, :, :L]
        out = tcn_block(x, weight, bias, gamma, beta, running_mean, running_var,
                        kernel_size=kernel_size, dilation=dilation,
                        tile_len=tile_len)
        out = jax.block_until_ready(out).astype(jnp.float32)
        x_bf = x.astype(jnp.bfloat16).astype(jnp.float32)
        w_bf = weight.astype(jnp.bfloat16).astype(jnp.float32)
        ref = _reference(x_bf, w_bf, bias, gamma, beta, running_mean,
                         running_var, kernel_size=kernel_size, dilation=dilation)
        assert out.shape == ref.shape, (out.shape, ref.shape)
        err = float(jnp.max(jnp.abs(out - ref)))
        assert jnp.allclose(out, ref, atol=2e-2, rtol=2e-2), err

    check(L=16, dilation=1, tile_len=512)   # single L-tile
    check(L=16, dilation=2, tile_len=512)   # dilated, single L-tile
    check(L=40, dilation=2, tile_len=16)    # multi-tile: exercises x double buffer

    print("KERNEL_OK")
</pallas_src>

<mosaic_0001>
module attributes {stable_mosaic.version = 11 : i64} {
  func.func @_tcn_block_kernel(%arg0: i32, %arg1: i32, %arg2: memref<2x24x128xbf16, #tpu.memory_space<any>>, %arg3: memref<384x128xbf16, #tpu.memory_space<vmem>>, %arg4: memref<2x128xf32, #tpu.memory_space<vmem>>, %arg5: memref<1x16x128xbf16, #tpu.memory_space<vmem>>, %arg6: memref<2x24x128xbf16, #tpu.memory_space<vmem>>, %arg7: memref<2x!tpu.dma_semaphore, #tpu.memory_space<semaphore_mem>>) attributes {dimension_semantics = [#tpu.dimension_semantics<parallel>, #tpu.dimension_semantics<arbitrary>], iteration_bounds = array<i64: 2, 1>, scalar_prefetch = 0 : i64, scratch_operands = 2 : i64, tpu.core_type = #tpu.core_type<tc>, window_params = [{}, {pipeline_mode = #tpu.pipeline_mode<synchronous>, transform_indices = @transform_1, window_bounds = array<i64: 384, 128>}, {pipeline_mode = #tpu.pipeline_mode<synchronous>, transform_indices = @transform_2, window_bounds = array<i64: 2, 128>}, {transform_indices = @transform_3, window_bounds = array<i64: 1, 16, 128>}]} {
    %c2_i32 = arith.constant 2 : i32
    %c0_i32 = arith.constant 0 : i32
    %0 = arith.cmpi eq, %c2_i32, %c0_i32 : i32
    %c1_i32 = arith.constant 1 : i32
    %1 = arith.select %0, %c1_i32, %c2_i32 : i32
    %2 = arith.remsi %arg1, %1 : i32
    %c0_i32_0 = arith.constant 0 : i32
    %3 = arith.cmpi ne, %2, %c0_i32_0 : i32
    %c0_i32_1 = arith.constant 0 : i32
    %4 = arith.cmpi slt, %2, %c0_i32_1 : i32
    %c0_i32_2 = arith.constant 0 : i32
    %5 = arith.cmpi slt, %1, %c0_i32_2 : i32
    %6 = arith.xori %4, %5 : i1
    %7 = arith.andi %6, %3 : i1
    %8 = arith.addi %2, %1 : i32
    %9 = arith.select %7, %8, %2 : i32
    %c0_i32_3 = arith.constant 0 : i32
    %10 = arith.cmpi eq, %arg1, %c0_i32_3 : i32
    %11 = arith.extui %10 : i1 to i32
    %c0_i32_4 = arith.constant 0 : i32
    %12 = arith.cmpi ne, %11, %c0_i32_4 : i32
    scf.if %12 {
      %c0_i32_25 = arith.constant 0 : i32
      %c0_i32_26 = arith.constant 0 : i32
      %c0_i32_27 = arith.constant 0 : i32
      %c0_i32_28 = arith.constant 0 : i32
      %54 = tpu.memref_slice %arg2[%arg0, %c0_i32_27, %c0_i32_28] : memref<2x24x128xbf16, #tpu.memory_space<any>> -> memref<1x24x128xbf16, #tpu.memory_space<any>>
      %55 = tpu.memref_squeeze %54 : memref<1x24x128xbf16, #tpu.memory_space<any>> -> memref<24x128xbf16, #tpu.memory_space<any>>
      %c0_i32_29 = arith.constant 0 : i32
      %c0_i32_30 = arith.constant 0 : i32
      %56 = tpu.memref_slice %arg6[%c0_i32_25, %c0_i32_29, %c0_i32_30] : memref<2x24x128xbf16, #tpu.memory_space<vmem>> -> memref<1x24x128xbf16, #tpu.memory_space<vmem>>
      %57 = tpu.memref_squeeze %56 : memref<1x24x128xbf16, #tpu.memory_space<vmem>> -> memref<24x128xbf16, #tpu.memory_space<vmem>>
      %58 = tpu.memref_slice %arg7[%c0_i32_26] : memref<2x!tpu.dma_semaphore, #tpu.memory_space<semaphore_mem>> -> memref<1x!tpu.dma_semaphore, #tpu.memory_space<semaphore_mem>>
      %59 = tpu.memref_squeeze %58 : memref<1x!tpu.dma_semaphore, #tpu.memory_space<semaphore_mem>> -> memref<!tpu.dma_semaphore, #tpu.memory_space<semaphore_mem>>
      tpu.enqueue_dma source(%55 : memref<24x128xbf16, #tpu.memory_space<any>>) target(%57 : memref<24x128xbf16, #tpu.memory_space<vmem>>) target_semaphore(%59 : memref<!tpu.dma_semaphore, #tpu.memory_space<semaphore_mem>>)
    } else {
    }
    %c16_i32 = arith.constant 16 : i32
    %13 = arith.muli %arg1, %c16_i32 : i32
    %c0_i32_5 = arith.constant 0 : i32
    %14 = tpu.memref_slice %arg2[%arg0, %13, %c0_i32_5] : memref<2x24x128xbf16, #tpu.memory_space<any>> -> memref<1x24x128xbf16, #tpu.memory_space<any>>
    %15 = tpu.memref_squeeze %14 : memref<1x24x128xbf16, #tpu.memory_space<any>> -> memref<24x128xbf16, #tpu.memory_space<any>>
    %c0_i32_6 = arith.constant 0 : i32
    %c0_i32_7 = arith.constant 0 : i32
    %16 = tpu.memref_slice %arg6[%9, %c0_i32_6, %c0_i32_7] : memref<2x24x128xbf16, #tpu.memory_space<vmem>> -> memref<1x24x128xbf16, #tpu.memory_space<vmem>>
    %17 = tpu.memref_squeeze %16 : memref<1x24x128xbf16, #tpu.memory_space<vmem>> -> memref<24x128xbf16, #tpu.memory_space<vmem>>
    %18 = tpu.memref_slice %arg7[%9] : memref<2x!tpu.dma_semaphore, #tpu.memory_space<semaphore_mem>> -> memref<1x!tpu.dma_semaphore, #tpu.memory_space<semaphore_mem>>
    %19 = tpu.memref_squeeze %18 : memref<1x!tpu.dma_semaphore, #tpu.memory_space<semaphore_mem>> -> memref<!tpu.dma_semaphore, #tpu.memory_space<semaphore_mem>>
    tpu.wait_dma2 semaphore(%19 : memref<!tpu.dma_semaphore, #tpu.memory_space<semaphore_mem>>) src(%15 : memref<24x128xbf16, #tpu.memory_space<any>>) dst(%17 : memref<24x128xbf16, #tpu.memory_space<vmem>>)
    %c1_i32_8 = arith.constant 1 : i32
    %20 = arith.addi %arg1, %c1_i32_8 : i32
    %c1_i32_9 = arith.constant 1 : i32
    %21 = arith.cmpi slt, %20, %c1_i32_9 : i32
    %22 = arith.extui %21 : i1 to i32
    %c0_i32_10 = arith.constant 0 : i32
    %23 = arith.cmpi ne, %22, %c0_i32_10 : i32
    scf.if %23 {
      %c1_i32_25 = arith.constant 1 : i32
      %54 = arith.addi %arg1, %c1_i32_25 : i32
      %c1_i32_26 = arith.constant 1 : i32
      %55 = arith.subi %c1_i32_26, %9 : i32
      %c16_i32_27 = arith.constant 16 : i32
      %56 = arith.muli %54, %c16_i32_27 : i32
      %c0_i32_28 = arith.constant 0 : i32
      %57 = tpu.memref_slice %arg2[%arg0, %56, %c0_i32_28] : memref<2x24x128xbf16, #tpu.memory_space<any>> -> memref<1x24x128xbf16, #tpu.memory_space<any>>
      %58 = tpu.memref_squeeze %57 : memref<1x24x128xbf16, #tpu.memory_space<any>> -> memref<24x128xbf16, #tpu.memory_space<any>>
      %c0_i32_29 = arith.constant 0 : i32
      %c0_i32_30 = arith.constant 0 : i32
      %59 = tpu.memref_slice %arg6[%55, %c0_i32_29, %c0_i32_30] : memref<2x24x128xbf16, #tpu.memory_space<vmem>> -> memref<1x24x128xbf16, #tpu.memory_space<vmem>>
      %60 = tpu.memref_squeeze %59 : memref<1x24x128xbf16, #tpu.memory_space<vmem>> -> memref<24x128xbf16, #tpu.memory_space<vmem>>
      %61 = tpu.memref_slice %arg7[%55] : memref<2x!tpu.dma_semaphore, #tpu.memory_space<semaphore_mem>> -> memref<1x!tpu.dma_semaphore, #tpu.memory_space<semaphore_mem>>
      %62 = tpu.memref_squeeze %61 : memref<1x!tpu.dma_semaphore, #tpu.memory_space<semaphore_mem>> -> memref<!tpu.dma_semaphore, #tpu.memory_space<semaphore_mem>>
      tpu.enqueue_dma source(%58 : memref<24x128xbf16, #tpu.memory_space<any>>) target(%60 : memref<24x128xbf16, #tpu.memory_space<vmem>>) target_semaphore(%62 : memref<!tpu.dma_semaphore, #tpu.memory_space<semaphore_mem>>)
    } else {
    }
    %24 = arith.index_cast %9 : i32 to index
    %c0 = arith.constant 0 : index
    %c0_11 = arith.constant 0 : index
    %25 = vector.load %arg6[%24, %c0, %c0_11] : memref<2x24x128xbf16, #tpu.memory_space<vmem>>, vector<1x24x128xbf16>
    %26 = vector.shape_cast %25 : vector<1x24x128xbf16> to vector<24x128xbf16>
    %27 = vector.extract_strided_slice %26 {offsets = [0, 0], sizes = [16, 128], strides = [1, 1]} : vector<24x128xbf16> to vector<16x128xbf16>
    %c0_12 = arith.constant 0 : index
    %c0_13 = arith.constant 0 : index
    %28 = vector.load %arg3[%c0_12, %c0_13] : memref<384x128xbf16, #tpu.memory_space<vmem>>, vector<128x128xbf16>
    %cst = arith.constant dense<0.000000e+00> : vector<16x128xf32>
    %29 = tpu.matmul %27, %28, %cst {dimension_numbers = #tpu.dot_dimension_numbers<[1], [0], [0], [1], [0, 0, 1, 1], [], []>} : vector<16x128xbf16>, vector<128x128xbf16>, vector<16x128xf32> -> vector<16x128xf32>
    %30 = vector.extract_strided_slice %26 {offsets = [1, 0], sizes = [16, 128], strides = [1, 1]} : vector<24x128xbf16> to vector<16x128xbf16>
    %c128 = arith.constant 128 : index
    %c0_14 = arith.constant 0 : index
    %31 = vector.load %arg3[%c128, %c0_14] : memref<384x128xbf16, #tpu.memory_space<vmem>>, vector<128x128xbf16>
    %cst_15 = arith.constant dense<0.000000e+00> : vector<16x128xf32>
    %32 = tpu.matmul %30, %31, %cst_15 {dimension_numbers = #tpu.dot_dimension_numbers<[1], [0], [0], [1], [0, 0, 1, 1], [], []>} : vector<16x128xbf16>, vector<128x128xbf16>, vector<16x128xf32> -> vector<16x128xf32>
    %33 = arith.addf %29, %32 : vector<16x128xf32>
    %34 = vector.extract_strided_slice %26 {offsets = [2, 0], sizes = [16, 128], strides = [1, 1]} : vector<24x128xbf16> to vector<16x128xbf16>
    %c256 = arith.constant 256 : index
    %c0_16 = arith.constant 0 : index
    %35 = vector.load %arg3[%c256, %c0_16] : memref<384x128xbf16, #tpu.memory_space<vmem>>, vector<128x128xbf16>
    %cst_17 = arith.constant dense<0.000000e+00> : vector<16x128xf32>
    %36 = tpu.matmul %34, %35, %cst_17 {dimension_numbers = #tpu.dot_dimension_numbers<[1], [0], [0], [1], [0, 0, 1, 1], [], []>} : vector<16x128xbf16>, vector<128x128xbf16>, vector<16x128xf32> -> vector<16x128xf32>
    %37 = arith.addf %33, %36 : vector<16x128xf32>
    %c0_18 = arith.constant 0 : index
    %c0_19 = arith.constant 0 : index
    %38 = vector.load %arg4[%c0_18, %c0_19] : memref<2x128xf32, #tpu.memory_space<vmem>>, vector<1x128xf32>
    %39 = vector.shape_cast %38 : vector<1x128xf32> to vector<128xf32>
    %40 = vector.shape_cast %39 : vector<128xf32> to vector<1x128xf32>
    %41 = vector.broadcast %40 : vector<1x128xf32> to vector<16x128xf32>
    %42 = arith.mulf %37, %41 : vector<16x128xf32>
    %c1 = arith.constant 1 : index
    %c0_20 = arith.constant 0 : index
    %43 = vector.load %arg4[%c1, %c0_20] : memref<2x128xf32, #tpu.memory_space<vmem>>, vector<1x128xf32>
    %44 = vector.shape_cast %43 : vector<1x128xf32> to vector<128xf32>
    %45 = vector.shape_cast %44 : vector<128xf32> to vector<1x128xf32>
    %46 = vector.broadcast %45 : vector<1x128xf32> to vector<16x128xf32>
    %47 = arith.addf %42, %46 : vector<16x128xf32>
    %cst_21 = arith.constant 0.000000e+00 : f32
    %48 = vector.broadcast %cst_21 : f32 to vector<16x128xf32>
    %49 = arith.maximumf %47, %48 : vector<16x128xf32>
    %50 = arith.truncf %49 : vector<16x128xf32> to vector<16x128xbf16>
    %c0_22 = arith.constant 0 : index
    %c0_23 = arith.constant 0 : index
    %c0_24 = arith.constant 0 : index
    %51 = vector.load %arg5[%c0_22, %c0_23, %c0_24] : memref<1x16x128xbf16, #tpu.memory_space<vmem>>, vector<1x16x128xbf16>
    %52 = vector.shape_cast %51 : vector<1x16x128xbf16> to vector<16x128xbf16>
    %53 = vector.shape_cast %50 : vector<16x128xbf16> to vector<1x16x128xbf16>
    tpu.vector_store %arg5[%c0_22, %c0_23, %c0_24], %53 {strides = array<i32>} : memref<1x16x128xbf16, #tpu.memory_space<vmem>>, vector<1x16x128xbf16>,
    return
  }
  func.func @transform_1(%arg0: i32, %arg1: i32) -> (i32, i32) {
    %c0_i32 = arith.constant 0 : i32
    %c0_i32_0 = arith.constant 0 : i32
    %c0_i32_1 = arith.constant 0 : i32
    return %c0_i32, %c0_i32_0 : i32, i32
  }
  func.func @transform_2(%arg0: i32, %arg1: i32) -> (i32, i32) {
    %c0_i32 = arith.constant 0 : i32
    %c0_i32_0 = arith.constant 0 : i32
    %c0_i32_1 = arith.constant 0 : i32
    return %c0_i32, %c0_i32_0 : i32, i32
  }
  func.func @transform_3(%arg0: i32, %arg1: i32) -> (i32, i32, i32) {
    %c0_i32 = arith.constant 0 : i32
    %c0_i32_0 = arith.constant 0 : i32
    return %arg0, %arg1, %c0_i32 : i32, i32, i32
  }
}

</mosaic_0001>

<llo_original>
// kernel: tpu_custom_call.1
$region0: #{tpu_custom_call.1}
  #allocation0 [shape = 'u32[]', space=smem, size = 0x4, offset = 0x4, fixed_abs, tag = 'smem constant byte address 0x4 - core index']
  #allocation1 [shape = 'u32[144,128]{1,0:T(1,128)}', space=vmem, size = 0x12000, scoped, tag = 'internal scratch']
  #allocation2 [shape = 'bf16[2,24,128]{2,1,0:T(8,128)(2,1)}', space=vmem, size = 0x3000, scoped, tag = 'scratch operand']
  #allocation3 [shape = 's32[2]{0}', space=sflag, size = 0x8, scoped, tag = 'scratch operand']
  #allocation8 [shape = 's32[]', space=sflag, size = 0x4, offset = 0, fixed_abs, tag = 'sflag constant byte address 0x0 - dummy sync flag']
  #allocation9 [shape = 's32[]', space=sflag, size = 0x4, offset = 0, fixed_abs, tag = 'sflag constant byte address 0x0 - dummy sync flag']
  #allocation10 [shape = 'u32[]', space=smem, size = 0x4, offset = 0x44, fixed_abs, tag = 'smem constant byte address 0x44 - assertion arg 0']
  #allocation11 [shape = 'u32[]', space=smem, size = 0x4, offset = 0x48, fixed_abs, tag = 'smem constant byte address 0x48 - assertion arg 1']
  #allocation12 [shape = 's32[]', space=sflag, size = 0x4, offset = 0, fixed_abs, tag = 'sflag constant byte address 0x0 - dummy sync flag']
  #allocation13 [shape = 's32[]', space=sflag, size = 0x4, offset = 0, fixed_abs, tag = 'sflag constant byte address 0x0 - dummy sync flag']
  %s0 = inlined_call_operand.hbm [shape: bf16[2,24,128], index: 0, kind: input, shape index: {}]
  %s1 = inlined_call_operand.hbm [shape: bf16[384,128], index: 1, kind: input, shape index: {}]
  %s2 = inlined_call_operand.vmem [shape: f32[2,128], index: 2, kind: input, shape index: {}]
  %s3 = inlined_call_operand.hbm [shape: bf16[2,16,128], index: 3, kind: output, shape index: {}]
  %s4 = sld [smem:[#allocation0]]
  $region61: #{tpu_custom_call.1} parent=0
    _
  %s6 = ssub.s32 1, %s4
  %s7 = scalar_select 0, %s6, %s4
  $region1: #{tpu_custom_call.1} parent=0
    #allocation4 [shape = 'u8[98304]{0}', space=vmem, size = 0x18000, scoped, tag = 'input window, operand 1, single buffered']
    #allocation5 [shape = 's32[2]{0}', space=sflag, size = 0x8, scoped, tag = 'scoped memory for tpu_custom_call.1']
    #allocation6 [shape = 's32[2]{0}', space=sflag, size = 0x8, scoped, tag = 'scoped memory for tpu_custom_call.1']
    #allocation7 [shape = 'u8[8192]{0}', space=vmem, size = 0x2000, scoped, tag = 'output window, operand 0']
    %8 = vsyncpa [#allocation5], 0
    %9 = vsyncpa [#allocation6], 0
    %s10 = scalar_lea.sflag [#allocation6], 1
    %11 = vsyncpa %s10, 0
    loop: start=0, step=1, limit=4
    $region2: #{tpu_custom_call.1} parent=1 // loop_pre_header
      _
    $region3: #{tpu_custom_call.1} parent=1 // loop_header
      %s13 = sphi 0, %s17
      %p14 = scmp.ge.s32.totalorder %s13, 4
      %s20 = sphi 0, %s32
      %s21 = sphi 0, %s28
      %s22 = sphi 0, %s20
      %s23 = sphi 0, %s21
      %s24 = sphi 0, %s22
      %s25 = sphi 0, %s23
      %s33 = sphi 0, %s33
      %s35 = sphi 0, %s33
      %s36 = sphi 0, %s35
      %s50 = sphi 0, %s36
      %s54 = sphi 0, %s54
      %s56 = sphi 0, %s54
      %s57 = sphi 0, %s56
      %s71 = sphi 0, %s57
      %s79 = sphi 0, %s81
      %s82 = sphi 0, %s79
      %s83 = sphi 0, %s82
      %s99 = sphi 0, %s83
    $region4: #{tpu_custom_call.1} parent=1 // loop_header_branch
      %16 = sbr.rel (%p14) target = $region8
    $region5: #{tpu_custom_call.1} parent=1 // loop_body
      %s18 = ssub.s32 %s13, 1
      %s19 = ssub.s32 %s13, 2
      %s26 = sadd.s32 1, %s21
      %p27 = scmp.ge.s32.totalorder %s26, 1
      %s28 = scalar_select %p27, 0, %s26
      %s29 = sadd.s32 1, %s20
      %s30 = scalar_select %p27, %s29, %s20
      %p31 = scmp.ge.s32.totalorder %s30, 2
      %s32 = scalar_select %p31, 0, %s30
      %s34 = sadd.s32 %s33, 1
      %p37 = scmp.eq.s32.totalorder %s13, 1
      %p38 = scmp.ne.s32.totalorder %s33, %s35
      %p39 = scmp.eq.s32.totalorder %s13, 0
      %p40 = por %p38, %p39
      %p41 = scmp.ne.s32.totalorder %s33, %s35
      %p42 = scmp.eq.s32.totalorder %s18, 1
      %p43 = por %p41, %p42
      %p44 = scmp.ne.s32.totalorder %s35, %s36
      %p45 = scmp.eq.s32.totalorder %s18, 0
      %p46 = por %p44, %p45
      %p47 = scmp.ne.s32.totalorder %s35, %s36
      %p48 = scmp.eq.s32.totalorder %s19, 1
      %p49 = por %p47, %p48
      %p51 = scmp.ne.s32.totalorder %s36, %s50
      %p52 = scmp.eq.s32.totalorder %s19, 0
      %p53 = por %p51, %p52
      %s55 = sadd.s32 %s54, 1
      %p58 = scmp.eq.s32.totalorder %s13, 1
      %p59 = scmp.ne.s32.totalorder %s54, %s56
      %p60 = scmp.eq.s32.totalorder %s13, 0
      %p61 = por %p59, %p60
      %p62 = scmp.ne.s32.totalorder %s54, %s56
      %p63 = scmp.eq.s32.totalorder %s18, 1
      %p64 = por %p62, %p63
      %p65 = scmp.ne.s32.totalorder %s56, %s57
      %p66 = scmp.eq.s32.totalorder %s18, 0
      %p67 = por %p65, %p66
      %p68 = scmp.ne.s32.totalorder %s56, %s57
      %p69 = scmp.eq.s32.totalorder %s19, 1
      %p70 = por %p68, %p69
      %p72 = scmp.ne.s32.totalorder %s57, %s71
      %p73 = scmp.eq.s32.totalorder %s19, 0
      %p74 = por %p72, %p73
      %s75 = ssub.s32 %s20, %s32
      %s76 = ssub.s32 %s21, %s28
      %s77 = sor.u32 %s75, %s76
      %p78 = scmp.eq.s32.totalorder %s77, 0
      %s80 = sadd.s32 %s79, 1
      %s81 = scalar_select %p78, %s79, %s80
      %p84 = pneg %p78
      %p85 = scmp.eq.s32.totalorder %s13, 1
      %p86 = por %p84, %p85
      %p87 = scmp.ne.s32.totalorder %s79, %s82
      %p88 = scmp.eq.s32.totalorder %s13, 0
      %p89 = por %p87, %p88
      %p90 = scmp.ne.s32.totalorder %s79, %s82
      %p91 = scmp.eq.s32.totalorder %s18, 1
      %p92 = por %p90, %p91
      %p93 = scmp.ne.s32.totalorder %s82, %s83
      %p94 = scmp.eq.s32.totalorder %s18, 0
      %p95 = por %p93, %p94
      %p96 = scmp.ne.s32.totalorder %s82, %s83
      %p97 = scmp.eq.s32.totalorder %s19, 1
      %p98 = por %p96, %p97
      %p100 = scmp.ne.s32.totalorder %s83, %s99
      %p101 = scmp.eq.s32.totalorder %s19, 0
      %p102 = por %p100, %p101
      %p103 = scmp.le.s32.totalorder 1, %s13
      %p104 = scmp.lt.s32.totalorder %s13, 3
      %p105 = pnand %p103, %p104
      %p106 = pneg %p105
      // Predicated region
      $region9: #{tpu_custom_call.1} parent=5 // pred_check
        _
      $region10: #{tpu_custom_call.1} parent=5 // pred_check_branch
        %108 = sbr.rel (%p105) target = $region12
      $region11: #{tpu_custom_call.1} parent=5 // pred_region
        %s109 = ssub.s32 %s13, 1
        // Predicated region
        $region13: #{tpu_custom_call.1} parent=11 // pred_check
          %p110 = pneg %p46
        $region14: #{tpu_custom_call.1} parent=11 // pred_check_branch
          %112 = sbr.rel (%p110) target = $region16
        $region15: #{tpu_custom_call.1} parent=11 // pred_region
          %s114 = ssub.s32 3072, 3072
          %115 = vsyncadd [#allocation5], %s114
          %s116 = sshll.u32 [#allocation4], 4
          %s117 = int_to_ptr.vmem [resolvable:$true] %s116
          %122 = dma.hbm_to_vmem [thread:$0]  %s1, 3072, %s117, [#allocation5], 64, 64, 4
        $region16: #{tpu_custom_call.1} parent=11 // pred_fallthru
          _
        // Predicated region
        $region17: #{tpu_custom_call.1} parent=11 // pred_check
          %p123 = pneg %p67
        $region18: #{tpu_custom_call.1} parent=11 // pred_check_branch
          %125 = sbr.rel (%p123) target = $region20
        $region19: #{tpu_custom_call.1} parent=11 // pred_region
          _
        $region20: #{tpu_custom_call.1} parent=11 // pred_fallthru
          _
      $region12: #{tpu_custom_call.1} parent=5 // pred_fallthru
        _
      %p126 = scmp.lt.s32.totalorder %s13, 2
      // Predicated region
      $region21: #{tpu_custom_call.1} parent=5 // pred_check
        %p127 = pneg %p126
      $region22: #{tpu_custom_call.1} parent=5 // pred_check_branch
        %129 = sbr.rel (%p127) target = $region24
      $region23: #{tpu_custom_call.1} parent=5 // pred_region
        _
      $region24: #{tpu_custom_call.1} parent=5 // pred_fallthru
        _
      %p130 = scmp.le.s32.totalorder 1, %s13
      %p131 = scmp.lt.s32.totalorder %s13, 3
      %p132 = pnand %p130, %p131
      %p133 = pneg %p132
      // Predicated region
      $region25: #{tpu_custom_call.1} parent=5 // pred_check
        _
      $region26: #{tpu_custom_call.1} parent=5 // pred_check_branch
        %135 = sbr.rel (%p132) target = $region28
      $region27: #{tpu_custom_call.1} parent=5 // pred_region
        %s136 = ssub.s32 %s13, 1
        // Predicated region
        $region29: #{tpu_custom_call.1} parent=27 // pred_check
          %p137 = pneg %p46
        $region30: #{tpu_custom_call.1} parent=27 // pred_check_branch
          %139 = sbr.rel (%p137) target = $region32
        $region31: #{tpu_custom_call.1} parent=27 // pred_region
          %140 = dma.done [#allocation5], 3072
        $region32: #{tpu_custom_call.1} parent=27 // pred_fallthru
          _
        %p141 = pneg %p46
        %p142 = pneg %p43
        %p143 = pneg %p67
        %p144 = pneg %p64
        %p145 = pneg %p95
        %p146 = pneg %p92
        %s147 = sand.u32 %s82, 1
        %s148 = scalar_lea.sflag [#allocation6], %s147
        %s149 = sand.u32 %s82, 1
        %s150 = smul.addr %s149, 8
        %s151 = scalar_lea.vmem [#allocation7], %s150
        %s152 = smul.u32 2, %s23
        %p154 = scmp.lt.s32.totalorder %s23, 0
        %s155 = ssub.s32 0, %s23
        %s156 = scalar_select %p154, %s155, %s23
        %s157 = sand.u32 %s156, 1
        %s158 = ssub.s32 0, %s157
        %s159 = scalar_select %p154, %s158, %s157
        %p160 = scmp.ne.s32.totalorder %s159, 0
        %p161 = scmp.lt.s32.totalorder %s159, 0
        %p162 = pnand %p161, %p160
        %p163 = pneg %p162
        %s164 = sadd.s32 %s159, 2
        %s165 = scalar_select %p163, %s164, %s159
        %p166 = scmp.eq.s32.totalorder %s23, 0
        // Predicated region
        $region33: #{tpu_custom_call.1} parent=27 // pred_check
          %p167 = pneg %p166
        $region34: #{tpu_custom_call.1} parent=27 // pred_check_branch
          %169 = sbr.rel (%p167) target = $region36
        $region35: #{tpu_custom_call.1} parent=27 // pred_region
          %s170 = smul.u32 %s22, 3
          %s171 = smul.addr %s170, 64
          %s172 = scalar_lea.hbm %s0, %s171
          // Predicated region
          $region37: #{tpu_custom_call.1} parent=35 // pred_check
            _
          $region38: #{tpu_custom_call.1} parent=35 // pred_check_branch
            %174 = sbr.rel target = $region40
          $region39: #{tpu_custom_call.1} parent=35 // pred_region
            %175 = sst [smem:[#allocation10]] [#allocation9]
            %176 = sst [smem:[#allocation11]] [#allocation8]
          $region40: #{tpu_custom_call.1} parent=35 // pred_fallthru
            _
          %178 = shalt.err (0)
          %s180 = sshll.u32 [#allocation2], 4
          %s181 = int_to_ptr.vmem [resolvable:$true] %s180
          %183 = dma.hbm_to_vmem [thread:$0]  %s172, 192, %s181, [#allocation3]
        $region36: #{tpu_custom_call.1} parent=27 // pred_fallthru
          _
        %s184 = smul.u32 %s165, 3
        %s185 = smul.addr %s184, 4
        %s186 = scalar_lea.vmem [#allocation2], %s185
        %s187 = scalar_lea.sflag [#allocation3], %s165
        %s188 = smul.u32 4, 3
        %s189 = smul.u32 %s188, 1
        %s190 = sshll.u32 %s189, 4
        %191 = dma.done %s187, %s190
        %s192 = sadd.s32 %s23, 1
        %p193 = scmp.lt.s32.totalorder %s192, 1
        // Predicated region
        $region41: #{tpu_custom_call.1} parent=27 // pred_check
          %p194 = pneg %p193
        $region42: #{tpu_custom_call.1} parent=27 // pred_check_branch
          %196 = sbr.rel (%p194) target = $region44
        $region43: #{tpu_custom_call.1} parent=27 // pred_region
          %s197 = ssub.s32 1, %s165
          %s198 = smul.u32 %s192, 16
          %s199 = sshra.s32 %s198, 3
          %s200 = sand.u32 %s198, 7
          %s201 = smul.u32 %s22, 3
          %s202 = sadd.s32 %s199, %s201
          %s203 = smul.addr %s202, 64
          %s204 = scalar_lea.hbm %s0, %s203
          %s205 = smul.u32 %s197, 3
          %s206 = smul.addr %s205, 4
          %s207 = scalar_lea.vmem [#allocation2], %s206
          %s208 = scalar_lea.sflag [#allocation3], %s197
          // Predicated region
          $region45: #{tpu_custom_call.1} parent=43 // pred_check
            _
          $region46: #{tpu_custom_call.1} parent=43 // pred_check_branch
            %210 = sbr.rel target = $region48
          $region47: #{tpu_custom_call.1} parent=43 // pred_region
            %211 = sst [smem:[#allocation10]] [#allocation13]
            %212 = sst [smem:[#allocation11]] [#allocation12]
          $region48: #{tpu_custom_call.1} parent=43 // pred_fallthru
            _
          %214 = shalt.err (0)
          %s216 = sshll.u32 %s207, 4
          %s217 = int_to_ptr.vmem [resolvable:$true] %s216
          %219 = dma.hbm_to_vmem [thread:$0]  %s204, 192, %s217, %s208
        $region44: #{tpu_custom_call.1} parent=27 // pred_fallthru
          _
        %v220 = vld [vmem:[%s186] sm:$0xf]
        %v221 = vld [vmem:[%s186 + $0x4] sm:$0xf]
        %v222 = vld [vmem:[%s186 + $0x8] sm:$0xf]
        %v223 = vld [vmem:[#allocation4] sm:$0xf]
        %v224 = vld [vmem:[#allocation4 + $0x4] sm:$0xf]
        %v225 = vld [vmem:[#allocation4 + $0x8] sm:$0xf]
        %v226 = vld [vmem:[#allocation4 + $0xc] sm:$0xf]
        %v227 = vld [vmem:[#allocation4 + $0x10] sm:$0xf]
        %v228 = vld [vmem:[#allocation4 + $0x14] sm:$0xf]
        %v229 = vld [vmem:[#allocation4 + $0x18] sm:$0xf]
        %v230 = vld [vmem:[#allocation4 + $0x1c] sm:$0xf]
        %v231 = vld [vmem:[#allocation4 + $0x20] sm:$0xf]
        %v232 = vld [vmem:[#allocation4 + $0x24] sm:$0xf]
        %v233 = vld [vmem:[#allocation4 + $0x28] sm:$0xf]
        %v234 = vld [vmem:[#allocation4 + $0x2c] sm:$0xf]
        %v235 = vld [vmem:[#allocation4 + $0x30] sm:$0xf]
        %v236 = vld [vmem:[#allocation4 + $0x34] sm:$0xf]
        %v237 = vld [vmem:[#allocation4 + $0x38] sm:$0xf]
        %v238 = vld [vmem:[#allocation4 + $0x3c] sm:$0xf]
        %v239 = vld [vmem:[#allocation4 + $0x40] sm:$0xf]
        %v240 = vld [vmem:[#allocation4 + $0x44] sm:$0xf]
        %v241 = vld [vmem:[#allocation4 + $0x48] sm:$0xf]
        %v242 = vld [vmem:[#allocation4 + $0x4c] sm:$0xf]
        %v243 = vld [vmem:[#allocation4 + $0x50] sm:$0xf]
        %v244 = vld [vmem:[#allocation4 + $0x54] sm:$0xf]
        %v245 = vld [vmem:[#allocation4 + $0x58] sm:$0xf]
        %v246 = vld [vmem:[#allocation4 + $0x5c] sm:$0xf]
        %v247 = vld [vmem:[#allocation4 + $0x60] sm:$0xf]
        %v248 = vld [vmem:[#allocation4 + $0x64] sm:$0xf]
        %v249 = vld [vmem:[#allocation4 + $0x68] sm:$0xf]
        %v250 = vld [vmem:[#allocation4 + $0x6c] sm:$0xf]
        %v251 = vld [vmem:[#allocation4 + $0x70] sm:$0xf]
        %v252 = vld [vmem:[#allocation4 + $0x74] sm:$0xf]
        %v253 = vld [vmem:[#allocation4 + $0x78] sm:$0xf]
        %v254 = vld [vmem:[#allocation4 + $0x7c] sm:$0xf]
        %v258 = vunpack.c.l.b16 %v220
        %v259 = vunpack.c.l.b16 %v221
        %v260 = vunpack.c.l.b16 %v222
        %v261 = vpack.c.b16 %v259, %v258
        %v262 = vpack.c.b16 %v260, %v260
        %vm263 = vsmask.f32 7424
        %v265 = vshrl.u32 %v261, 16
        %v267 = vshll.u32 %v261, 16
        %v269 = vrot.slane %v267, 1
        %v270 = vor.u32 %v265, %v269
        %v272 = vshll.u32 %v262, 16
        %v274 = vrot.slane %v272, 1
        %v275 = vsel %vm263, %v270, %v274
        %v293 = vunpack.c.l.b16 %v239
        %v294 = vunpack.c.l.b16 %v240
        %v295 = vunpack.c.l.b16 %v241
        %v296 = vunpack.c.l.b16 %v242
        %v297 = vunpack.c.l.b16 %v243
        %v298 = vunpack.c.l.b16 %v244
        %v299 = vunpack.c.l.b16 %v245
        %v300 = vunpack.c.l.b16 %v246
        %v301 = vunpack.c.l.b16 %v247
        %v302 = vunpack.c.l.b16 %v248
        %v303 = vunpack.c.l.b16 %v249
        %v304 = vunpack.c.l.b16 %v250
        %v305 = vunpack.c.l.b16 %v251
        %v306 = vunpack.c.l.b16 %v252
        %v307 = vunpack.c.l.b16 %v253
        %v308 = vunpack.c.l.b16 %v254
        %v309 = vpack.c.b16 %v294, %v293
        %v310 = vpack.c.b16 %v296, %v295
        %v311 = vpack.c.b16 %v298, %v297
        %v312 = vpack.c.b16 %v300, %v299
        %v313 = vpack.c.b16 %v302, %v301
        %v314 = vpack.c.b16 %v304, %v303
        %v315 = vpack.c.b16 %v306, %v305
        %v316 = vpack.c.b16 %v308, %v307
        %325 = vmatprep.subr.bf16.mxu0 0
        %326 = vmatpush1.bf16.msra.mxu0 %v316
        %327 = vmatprep.subr.bf16.mxu0 0
        %328 = vmatpush1.bf16.msra.mxu0 %v315
        %329 = vmatprep.subr.bf16.mxu0 0
        %330 = vmatpush1.bf16.msra.mxu0 %v314
        %331 = vmatprep.subr.bf16.mxu0 0
        %332 = vmatpush1.bf16.msra.mxu0 %v313
        %333 = vmatprep.subr.bf16.mxu0 0
        %334 = vmatpush1.bf16.msra.mxu0 %v312
        %335 = vmatprep.subr.bf16.mxu0 0
        %336 = vmatpush1.bf16.msra.mxu0 %v311
        %337 = vmatprep.subr.bf16.mxu0 0
        %338 = vmatpush1.bf16.msra.mxu0 %v310
        %339 = vmatprep.subr.bf16.mxu0 0
        %340 = vmatpush1.bf16.msra.mxu0 %v309
        %341 = vmatprep.subr.bf16.mxu0 0
        %342 = vmatpush2.bf16.msra.mxu0 0
        %343 = vmatprep.subr.bf16.mxu0 0
        %344 = vmatpush2.bf16.msra.mxu0 0
        %345 = vmatprep.subr.bf16.mxu0 0
        %346 = vmatpush2.bf16.msra.mxu0 0
        %347 = vmatprep.subr.bf16.mxu0 0
        %348 = vmatpush2.bf16.msra.mxu0 0
        %349 = vmatprep.subr.bf16.mxu0 0
        %350 = vmatpush2.bf16.msra.mxu0 0
        %351 = vmatprep.subr.bf16.mxu0 0
        %352 = vmatpush2.bf16.msra.mxu0 0
        %353 = vmatprep.subr.bf16.mxu0 0
        %354 = vmatpush2.bf16.msra.mxu0 0
        %355 = vmatprep.subr.bf16.mxu0 0
        %356 = vmatpush2.bf16.msra.mxu0 0
        %357 = vmatprep.mubr.bf16.mxu0 0
        %358 = vmatmul.mubr.bf16.gmra.mxu0 %v275
        %v359 = vpop.f32.mrf.mxu0
        %v360 = vadd.f32 0.0, %v359
        %v361 = vpop.f32.mrf.mxu0
        %v362 = vpop.f32.mrf.mxu0
        %v363 = vadd.f32 0.0, %v362
        %v364 = vpop.f32.mrf.mxu0
        %365 = vdwg.mxu0
        %v383 = vunpack.c.l.b16 %v223
        %v384 = vunpack.c.l.b16 %v224
        %v385 = vunpack.c.l.b16 %v225
        %v386 = vunpack.c.l.b16 %v226
        %v387 = vunpack.c.l.b16 %v227
        %v388 = vunpack.c.l.b16 %v228
        %v389 = vunpack.c.l.b16 %v229
        %v390 = vunpack.c.l.b16 %v230
        %v391 = vunpack.c.l.b16 %v231
        %v392 = vunpack.c.l.b16 %v232
        %v393 = vunpack.c.l.b16 %v233
        %v394 = vunpack.c.l.b16 %v234
        %v395 = vunpack.c.l.b16 %v235
        %v396 = vunpack.c.l.b16 %v236
        %v397 = vunpack.c.l.b16 %v237
        %v398 = vunpack.c.l.b16 %v238
        %v399 = vpack.c.b16 %v384, %v383
        %v400 = vpack.c.b16 %v386, %v385
        %v401 = vpack.c.b16 %v388, %v387
        %v402 = vpack.c.b16 %v390, %v389
        %v403 = vpack.c.b16 %v392, %v391
        %v404 = vpack.c.b16 %v394, %v393
        %v405 = vpack.c.b16 %v396, %v395
        %v406 = vpack.c.b16 %v398, %v397
        %415 = vmatprep.subr.bf16.mxu0 0
        %416 = vmatpush1.bf16.msra.mxu0 %v406
        %417 = vmatprep.subr.bf16.mxu0 0
        %418 = vmatpush1.bf16.msra.mxu0 %v405
        %419 = vmatprep.subr.bf16.mxu0 0
        %420 = vmatpush1.bf16.msra.mxu0 %v404
        %421 = vmatprep.subr.bf16.mxu0 0
        %422 = vmatpush1.bf16.msra.mxu0 %v403
        %423 = vmatprep.subr.bf16.mxu0 0
        %424 = vmatpush1.bf16.msra.mxu0 %v402
        %425 = vmatprep.subr.bf16.mxu0 0
        %426 = vmatpush1.bf16.msra.mxu0 %v401
        %427 = vmatprep.subr.bf16.mxu0 0
        %428 = vmatpush1.bf16.msra.mxu0 %v400
        %429 = vmatprep.subr.bf16.mxu0 0
        %430 = vmatpush1.bf16.msra.mxu0 %v399
        %431 = vmatprep.subr.bf16.mxu0 0
        %432 = vmatpush2.bf16.msra.mxu0 0
        %433 = vmatprep.subr.bf16.mxu0 0
        %434 = vmatpush2.bf16.msra.mxu0 0
        %435 = vmatprep.subr.bf16.mxu0 0
        %436 = vmatpush2.bf16.msra.mxu0 0
        %437 = vmatprep.subr.bf16.mxu0 0
        %438 = vmatpush2.bf16.msra.mxu0 0
        %439 = vmatprep.subr.bf16.mxu0 0
        %440 = vmatpush2.bf16.msra.mxu0 0
        %441 = vmatprep.subr.bf16.mxu0 0
        %442 = vmatpush2.bf16.msra.mxu0 0
        %443 = vmatprep.subr.bf16.mxu0 0
        %444 = vmatpush2.bf16.msra.mxu0 0
        %445 = vmatprep.subr.bf16.mxu0 0
        %446 = vmatpush2.bf16.msra.mxu0 0
        %447 = vmatprep.mubr.bf16.mxu0 0
        %448 = vmatmul.mubr.bf16.gmra.mxu0 %v261
        %v449 = vpop.f32.mrf.mxu0
        %v450 = vadd.f32 %v360, %v449
        %v451 = vpop.f32.mrf.mxu0
        %v452 = vpop.f32.mrf.mxu0
        %v453 = vadd.f32 %v363, %v452
        %v454 = vpop.f32.mrf.mxu0
        %455 = vdwg.mxu0
        %v456 = vld [vmem:[#allocation4 + $0x80] sm:$0xf]
        %v457 = vld [vmem:[#allocation4 + $0x84] sm:$0xf]
        %v458 = vld [vmem:[#allocation4 + $0x88] sm:$0xf]
        %v459 = vld [vmem:[#allocation4 + $0x8c] sm:$0xf]
        %v460 = vld [vmem:[#allocation4 + $0x90] sm:$0xf]
        %v461 = vld [vmem:[#allocation4 + $0x94] sm:$0xf]
        %v462 = vld [vmem:[#allocation4 + $0x98] sm:$0xf]
        %v463 = vld [vmem:[#allocation4 + $0x9c] sm:$0xf]
        %v464 = vld [vmem:[#allocation4 + $0xa0] sm:$0xf]
        %v465 = vld [vmem:[#allocation4 + $0xa4] sm:$0xf]
        %v466 = vld [vmem:[#allocation4 + $0xa8] sm:$0xf]
        %v467 = vld [vmem:[#allocation4 + $0xac] sm:$0xf]
        %v468 = vld [vmem:[#allocation4 + $0xb0] sm:$0xf]
        %v469 = vld [vmem:[#allocation4 + $0xb4] sm:$0xf]
        %v470 = vld [vmem:[#allocation4 + $0xb8] sm:$0xf]
        %v471 = vld [vmem:[#allocation4 + $0xbc] sm:$0xf]
        %vm472 = vcmask 1046528
        %v473 = vrot.slane %v261, 1
        %v474 = vrot.slane %v262, 1
        %v475 = vsel %vm472, %v473, %v474
        %v493 = vunpack.c.l.b16 %v456
        %v494 = vunpack.c.l.b16 %v457
        %v495 = vunpack.c.l.b16 %v458
        %v496 = vunpack.c.l.b16 %v459
        %v497 = vunpack.c.l.b16 %v460
        %v498 = vunpack.c.l.b16 %v461
        %v499 = vunpack.c.l.b16 %v462
        %v500 = vunpack.c.l.b16 %v463
        %v501 = vunpack.c.l.b16 %v464
        %v502 = vunpack.c.l.b16 %v465
        %v503 = vunpack.c.l.b16 %v466
        %v504 = vunpack.c.l.b16 %v467
        %v505 = vunpack.c.l.b16 %v468
        %v506 = vunpack.c.l.b16 %v469
        %v507 = vunpack.c.l.b16 %v470
        %v508 = vunpack.c.l.b16 %v471
        %v509 = vpack.c.b16 %v494, %v493
        %v510 = vpack.c.b16 %v496, %v495
        %v511 = vpack.c.b16 %v498, %v497
        %v512 = vpack.c.b16 %v500, %v499
        %v513 = vpack.c.b16 %v502, %v501
        %v514 = vpack.c.b16 %v504, %v503
        %v515 = vpack.c.b16 %v506, %v505
        %v516 = vpack.c.b16 %v508, %v507
        %525 = vmatprep.subr.bf16.mxu0 0
        %526 = vmatpush1.bf16.msra.mxu0 %v516
        %527 = vmatprep.subr.bf16.mxu0 0
        %528 = vmatpush1.bf16.msra.mxu0 %v515
        %529 = vmatprep.subr.bf16.mxu0 0
        %530 = vmatpush1.bf16.msra.mxu0 %v514
        %531 = vmatprep.subr.bf16.mxu0 0
        %532 = vmatpush1.bf16.msra.mxu0 %v513
        %533 = vmatprep.subr.bf16.mxu0 0
        %534 = vmatpush1.bf16.msra.mxu0 %v512
        %535 = vmatprep.subr.bf16.mxu0 0
        %536 = vmatpush1.bf16.msra.mxu0 %v511
        %537 = vmatprep.subr.bf16.mxu0 0
        %538 = vmatpush1.bf16.msra.mxu0 %v510
        %539 = vmatprep.subr.bf16.mxu0 0
        %540 = vmatpush1.bf16.msra.mxu0 %v509
        %541 = vmatprep.subr.bf16.mxu0 0
        %542 = vmatpush2.bf16.msra.mxu0 0
        %543 = vmatprep.subr.bf16.mxu0 0
        %544 = vmatpush2.bf16.msra.mxu0 0
        %545 = vmatprep.subr.bf16.mxu0 0
        %546 = vmatpush2.bf16.msra.mxu0 0
        %547 = vmatprep.subr.bf16.mxu0 0
        %548 = vmatpush2.bf16.msra.mxu0 0
        %549 = vmatprep.subr.bf16.mxu0 0
        %550 = vmatpush2.bf16.msra.mxu0 0
        %551 = vmatprep.subr.bf16.mxu0 0
        %552 = vmatpush2.bf16.msra.mxu0 0
        %553 = vmatprep.subr.bf16.mxu0 0
        %554 = vmatpush2.bf16.msra.mxu0 0
        %555 = vmatprep.subr.bf16.mxu0 0
        %556 = vmatpush2.bf16.msra.mxu0 0
        %557 = vmatprep.mubr.bf16.mxu0 0
        %558 = vmatmul.mubr.bf16.gmra.mxu0 %v475
        %v559 = vpop.f32.mrf.mxu0
        %v560 = vadd.f32 0.0, %v559
        %v561 = vpop.f32.mrf.mxu0
        %v562 = vpop.f32.mrf.mxu0
        %v563 = vadd.f32 0.0, %v562
        %v564 = vpop.f32.mrf.mxu0
        %565 = vdwg.mxu0
        %v566 = vadd.f32 %v450, %v560
        %v567 = vadd.f32 %v453, %v563
        %v568 = vld [vmem:[%s2] sm:$0x1]
        %v569 = vlaneseq
        %v570 = vshrl.u32 %v569, 7
        %v571 = vsub.s32 0, %v570
        %v572 = vrot.slane %v568, %v571
        %v573 = vmul.f32 %v566, %v572
        %v574 = vmul.f32 %v567, %v572
        %v575 = vld [vmem:[%s2 + $0x1] sm:$0x1]
        %v576 = vlaneseq
        %v577 = vshrl.u32 %v576, 7
        %v578 = vsub.s32 0, %v577
        %v579 = vrot.slane %v575, %v578
        %v580 = vadd.f32 %v573, %v579
        %v581 = vadd.f32 %v574, %v579
        %v582 = vmax.f32 %v580, 0.0
        %v583 = vmax.f32 %v581, 0.0
        %v584 = vpack.c.bf16 %v583, %v582
        %v586 = vunpack.c.l.b16 %v584
        %v587 = vunpack.c.h.b16 %v584
        %v588 = vpack.c.b16 %v586, %v586
        %v589 = vpack.c.b16 %v587, %v587
        %592 = vst [vmem:[%s151] sm:$0xf] %v588
        %593 = vst [vmem:[%s151 + $0x4] sm:$0xf] %v589
        %s594 = sand.u32 %s82, 1
        %s595 = scalar_lea.sflag [#allocation6], %s594
        %s596 = sand.u32 %s82, 1
        %s597 = smul.addr %s596, 8
        %s598 = scalar_lea.vmem [#allocation7], %s597
        // Predicated region
        $region49: #{tpu_custom_call.1} parent=27 // pred_check
          %p599 = pneg %p92
        $region50: #{tpu_custom_call.1} parent=27 // pred_check_branch
          %601 = sbr.rel (%p599) target = $region52
        $region51: #{tpu_custom_call.1} parent=27 // pred_region
          %s602 = smul.u32 2, %s23
          %s604 = ssub.s32 128, 128
          %605 = vsyncadd %s595, %s604
          %s606 = smul.addr %s22, 2
          %s607 = sadd.s32 %s602, %s606
          %s608 = smul.addr %s607, 64
          %s609 = scalar_lea.hbm %s3, %s608
          %s610 = sshll.u32 %s598, 4
          %s611 = int_to_ptr.vmem [resolvable:$true] %s610
          %616 = dma.vmem_to_hbm [thread:$0]  %s611, 128, %s609, %s595, 64, 64, 4
        $region52: #{tpu_custom_call.1} parent=27 // pred_fallthru
          _
      $region28: #{tpu_custom_call.1} parent=5 // pred_fallthru
        _
      %p617 = scmp.le.s32.totalorder 2, %s13
      // Predicated region
      $region53: #{tpu_custom_call.1} parent=5 // pred_check
        %p618 = pneg %p617
      $region54: #{tpu_custom_call.1} parent=5 // pred_check_branch
        %620 = sbr.rel (%p618) target = $region56
      $region55: #{tpu_custom_call.1} parent=5 // pred_region
        %s621 = ssub.s32 %s13, 2
        // Predicated region
        $region57: #{tpu_custom_call.1} parent=55 // pred_check
          %p622 = pneg %p98
        $region58: #{tpu_custom_call.1} parent=55 // pred_check_branch
          %624 = sbr.rel (%p622) target = $region60
        $region59: #{tpu_custom_call.1} parent=55 // pred_region
          %s625 = sand.u32 %s83, 1
          %s626 = scalar_lea.sflag [#allocation6], %s625
          %s627 = sand.u32 %s83, 1
          %s628 = smul.addr %s627, 8
          %s629 = scalar_lea.vmem [#allocation7], %s628
          %630 = dma.done %s626, 128
        $region60: #{tpu_custom_call.1} parent=55 // pred_fallthru
          _
      $region56: #{tpu_custom_call.1} parent=5 // pred_fallthru
        _
    $region6: #{tpu_custom_call.1} parent=1 // loop_footer
      %s17 = sadd.s32 1, %s13
    $region7: #{tpu_custom_call.1} parent=1 // loop_footer_branch
      %12 = sbr.rel target = $region3
    $region8: #{tpu_custom_call.1} parent=1 // loop_exit
      _
    %631 = vsyncpa [#allocation5], 1
    %s632 = scalar_lea.sflag [#allocation5], 1
    %633 = vsyncpa %s632, 1
    %634 = vsyncpa [#allocation6], 1
    %s635 = scalar_lea.sflag [#allocation6], 1
    %636 = vsyncpa %s635, 1
  %637 = vsyncmov [#allocation3]
  %s638 = vpop.sfrf %637
  %p639 = scmp.eq.s32.totalorder %s638, 0
  %p640 = pneg %p639
  %642 = shalt.err (%p640)
  %s643 = scalar_lea.sflag [#allocation3], 1
  %644 = vsyncmov %s643
  %s645 = vpop.sfrf %644
  %p646 = scmp.eq.s32.totalorder %s645, 0
  %p647 = pneg %p646
  %649 = shalt.err (%p647)

</llo_original>
